<compile_context>
chip_gen: v5e
topology: v5e:2x2
jax: 0.10.0
libtpu: 0.0.40
codegen_flags: <defaults>
</compile_context>

<pallas_src>
import math

import jax
import jax.numpy as jnp
from jax.experimental import pallas as pl
from jax.experimental.pallas import tpu as pltpu


def qnet_kernel(xT_ref, w1_ref, b1_ref, w2_ref, b2_ref, oT_ref):
    # fc1 on the MXU in the transposed (batch-on-lanes) domain:
    #   (H, S) @ (S, tb) -> (H, tb), f32 accumulation.
    h = jnp.dot(w1_ref[...], xT_ref[...], preferred_element_type=jnp.float32)
    # Bias (H, 1) broadcasts across lanes (batch); ReLU at full lane width (VPU).
    h = jnp.maximum(h + b1_ref[...], 0.0)
    # fc2: (A, H) @ (H, tb) -> (A, tb), f32 accumulation.
    out = jnp.dot(w2_ref[...], h, preferred_element_type=jnp.float32)
    # Lane-dense store: last dim is the batch tile (multiple of 128 or full array).
    oT_ref[...] = (out + b2_ref[...]).astype(oT_ref.dtype)


def qnet_forward_t(xT, w1, b1, w2, b2, *, tile_b=16384, out_dtype=None,
                   core_parallel=False):
    """Fused Qnet forward in the transposed (batch-last) domain.

    xT: (state_dim, batch) float32
    w1: (hidden_dim, state_dim)   b1: (hidden_dim, 1)     (PyTorch Linear layout)
    w2: (action_dim, hidden_dim)  b2: (action_dim, 1)
    Returns (action_dim, batch) in `out_dtype` (default: xT.dtype).
    """
    state_dim, batch = xT.shape
    action_dim = w2.shape[0]
    out_dtype = xT.dtype if out_dtype is None else out_dtype

    if batch <= tile_b:
        tb = batch                      # single block == full array dims: always legal
    else:
        tb = max(128, (tile_b // 128) * 128)   # lane-tileable batch tile
    grid = (pl.cdiv(batch, tb),)        # edge block (if any) is masked by Pallas

    def const_spec(a):
        # Same block every grid step -> stays VMEM-resident, no per-step DMA.
        return pl.BlockSpec(a.shape, lambda i: (0,) * a.ndim)

    # CORE_PARALLEL shards the batch tiles across v7x's two TensorCores.
    semantics = (pltpu.CORE_PARALLEL if core_parallel else "parallel",)

    return pl.pallas_call(
        qnet_kernel,
        out_shape=jax.ShapeDtypeStruct((action_dim, batch), out_dtype),
        grid=grid,
        in_specs=[
            pl.BlockSpec((state_dim, tb), lambda i: (0, i)),   # xT: streamed per tile
            const_spec(w1),
            const_spec(b1),
            const_spec(w2),
            const_spec(b2),
        ],
        out_specs=pl.BlockSpec((action_dim, tb), lambda i: (0, i)),
        compiler_params=pltpu.CompilerParams(dimension_semantics=semantics),
    )(xT, w1, b1, w2, b2)


def qnet_forward(x, w1, b1, w2, b2, **kwargs):
    """PyTorch-interface wrapper: x (batch, state_dim) -> (batch, action_dim).

    The two transposes are layout plumbing only; callers that can keep
    activations batch-last should call qnet_forward_t directly and skip both.
    """
    outT = qnet_forward_t(x.T, w1, b1, w2, b2, **kwargs)
    return outT.T


def init_qnet_params(key, state_dim, hidden_dim, action_dim, dtype=jnp.float32):
    """torch.nn.Linear default init U(-1/sqrt(fan_in), 1/sqrt(fan_in)).

    Weights are stored in PyTorch (out_features, in_features) layout; biases as
    (out_features, 1) columns so they lane-broadcast in the transposed kernel.
    """
    k1, k2, k3, k4 = jax.random.split(key, 4)
    bound1 = 1.0 / math.sqrt(state_dim)
    bound2 = 1.0 / math.sqrt(hidden_dim)
    w1 = jax.random.uniform(k1, (hidden_dim, state_dim), dtype, -bound1, bound1)
    b1 = jax.random.uniform(k2, (hidden_dim, 1), dtype, -bound1, bound1)
    w2 = jax.random.uniform(k3, (action_dim, hidden_dim), dtype, -bound2, bound2)
    b2 = jax.random.uniform(k4, (action_dim, 1), dtype, -bound2, bound2)
    return w1, b1, w2, b2


def _reference(x, w1, b1, w2, b2):
    """Pure-f32 reference: relu(x @ W1^T + b1) @ W2^T + b2 (PyTorch semantics)."""
    hp = jax.lax.Precision.HIGHEST
    h = jnp.maximum(jnp.dot(x, w1.T, precision=hp) + b1[:, 0], 0.0)
    return jnp.dot(h, w2.T, precision=hp) + b2[:, 0]


if __name__ == "__main__":
    # Small shapes consistent with the module: state_dim=16, hidden_dim=32, action_dim=4.
    batch, state_dim, hidden_dim, action_dim = 2, 16, 32, 4

    key = jax.random.PRNGKey(0)
    kx, kp, kx2 = jax.random.split(key, 3)
    x = jax.random.normal(kx, (batch, state_dim), dtype=jnp.float32)
    w1, b1, w2, b2 = init_qnet_params(kp, state_dim, hidden_dim, action_dim)

    # Tiny-batch path: single grid step, block == full array dims.
    out = jax.block_until_ready(qnet_forward(x, w1, b1, w2, b2))
    assert out.shape == (batch, action_dim)
    # Tolerance covers worst-case MXU f32 decomposition; in practice the match
    # is ~1e-6 since every stage stays in float32.  Structural bugs are O(1).
    assert jnp.allclose(out, _reference(x, w1, b1, w2, b2), atol=2e-2, rtol=2e-2)

    # Multi-tile path: batch not a multiple of the tile exercises the cdiv grid
    # and Pallas' masked edge block (1040 = 4*256 + a 16-lane partial block).
    big_batch = 1040
    xb = jax.random.normal(kx2, (big_batch, state_dim), dtype=jnp.float32)
    out_b = jax.block_until_ready(qnet_forward(xb, w1, b1, w2, b2, tile_b=256))
    assert out_b.shape == (big_batch, action_dim)
    assert jnp.allclose(out_b, _reference(xb, w1, b1, w2, b2), atol=2e-2, rtol=2e-2)

    print("KERNEL_OK")
</pallas_src>

<mosaic_0001>
module attributes {stable_mosaic.version = 11 : i64} {
  func.func @qnet_kernel(%arg0: i32, %arg1: memref<16x2xf32, #tpu.memory_space<vmem>>, %arg2: memref<32x16xf32, #tpu.memory_space<vmem>>, %arg3: memref<32x1xf32, #tpu.memory_space<vmem>>, %arg4: memref<4x32xf32, #tpu.memory_space<vmem>>, %arg5: memref<4x1xf32, #tpu.memory_space<vmem>>, %arg6: memref<4x2xf32, #tpu.memory_space<vmem>>) attributes {dimension_semantics = [#tpu.dimension_semantics<parallel>], iteration_bounds = array<i64: 1>, scalar_prefetch = 0 : i64, scratch_operands = 0 : i64, tpu.core_type = #tpu.core_type<tc>, window_params = [{transform_indices = @transform_0, window_bounds = array<i64: 16, 2>}, {pipeline_mode = #tpu.pipeline_mode<synchronous>, transform_indices = @transform_1, window_bounds = array<i64: 32, 16>}, {pipeline_mode = #tpu.pipeline_mode<synchronous>, transform_indices = @transform_2, window_bounds = array<i64: 32, 1>}, {pipeline_mode = #tpu.pipeline_mode<synchronous>, transform_indices = @transform_3, window_bounds = array<i64: 4, 32>}, {pipeline_mode = #tpu.pipeline_mode<synchronous>, transform_indices = @transform_4, window_bounds = array<i64: 4, 1>}, {transform_indices = @transform_5, window_bounds = array<i64: 4, 2>}]} {
    %c0 = arith.constant 0 : index
    %c0_0 = arith.constant 0 : index
    %0 = vector.load %arg2[%c0, %c0_0] : memref<32x16xf32, #tpu.memory_space<vmem>>, vector<32x16xf32>
    %c0_1 = arith.constant 0 : index
    %c0_2 = arith.constant 0 : index
    %1 = vector.load %arg1[%c0_1, %c0_2] : memref<16x2xf32, #tpu.memory_space<vmem>>, vector<16x2xf32>
    %cst = arith.constant dense<0.000000e+00> : vector<32x2xf32>
    %2 = tpu.matmul %0, %1, %cst {dimension_numbers = #tpu.dot_dimension_numbers<[1], [0], [0], [1], [0, 0, 1, 1], [], []>} : vector<32x16xf32>, vector<16x2xf32>, vector<32x2xf32> -> vector<32x2xf32>
    %c0_3 = arith.constant 0 : index
    %c0_4 = arith.constant 0 : index
    %3 = vector.load %arg3[%c0_3, %c0_4] : memref<32x1xf32, #tpu.memory_space<vmem>>, vector<32x1xf32>
    %4 = vector.broadcast %3 : vector<32x1xf32> to vector<32x2xf32>
    %5 = arith.addf %2, %4 : vector<32x2xf32>
    %cst_5 = arith.constant 0.000000e+00 : f32
    %6 = vector.broadcast %cst_5 : f32 to vector<32x2xf32>
    %7 = arith.maximumf %5, %6 : vector<32x2xf32>
    %c0_6 = arith.constant 0 : index
    %c0_7 = arith.constant 0 : index
    %8 = vector.load %arg4[%c0_6, %c0_7] : memref<4x32xf32, #tpu.memory_space<vmem>>, vector<4x32xf32>
    %cst_8 = arith.constant dense<0.000000e+00> : vector<4x2xf32>
    %9 = tpu.matmul %8, %7, %cst_8 {dimension_numbers = #tpu.dot_dimension_numbers<[1], [0], [0], [1], [0, 0, 1, 1], [], []>} : vector<4x32xf32>, vector<32x2xf32>, vector<4x2xf32> -> vector<4x2xf32>
    %c0_9 = arith.constant 0 : index
    %c0_10 = arith.constant 0 : index
    %10 = vector.load %arg5[%c0_9, %c0_10] : memref<4x1xf32, #tpu.memory_space<vmem>>, vector<4x1xf32>
    %11 = vector.broadcast %10 : vector<4x1xf32> to vector<4x2xf32>
    %12 = arith.addf %9, %11 : vector<4x2xf32>
    %c0_11 = arith.constant 0 : index
    %c0_12 = arith.constant 0 : index
    %13 = vector.load %arg6[%c0_11, %c0_12] : memref<4x2xf32, #tpu.memory_space<vmem>>, vector<4x2xf32>
    tpu.vector_store %arg6[%c0_11, %c0_12], %12 {strides = array<i32>} : memref<4x2xf32, #tpu.memory_space<vmem>>, vector<4x2xf32>,
    return
  }
  func.func @transform_0(%arg0: i32) -> (i32, i32) {
    %c0_i32 = arith.constant 0 : i32
    %c0_i32_0 = arith.constant 0 : i32
    return %c0_i32, %arg0 : i32, i32
  }
  func.func @transform_1(%arg0: i32) -> (i32, i32) {
    %c0_i32 = arith.constant 0 : i32
    %c0_i32_0 = arith.constant 0 : i32
    %c0_i32_1 = arith.constant 0 : i32
    return %c0_i32, %c0_i32_0 : i32, i32
  }
  func.func @transform_2(%arg0: i32) -> (i32, i32) {
    %c0_i32 = arith.constant 0 : i32
    %c0_i32_0 = arith.constant 0 : i32
    %c0_i32_1 = arith.constant 0 : i32
    return %c0_i32, %c0_i32_0 : i32, i32
  }
  func.func @transform_3(%arg0: i32) -> (i32, i32) {
    %c0_i32 = arith.constant 0 : i32
    %c0_i32_0 = arith.constant 0 : i32
    %c0_i32_1 = arith.constant 0 : i32
    return %c0_i32, %c0_i32_0 : i32, i32
  }
  func.func @transform_4(%arg0: i32) -> (i32, i32) {
    %c0_i32 = arith.constant 0 : i32
    %c0_i32_0 = arith.constant 0 : i32
    %c0_i32_1 = arith.constant 0 : i32
    return %c0_i32, %c0_i32_0 : i32, i32
  }
  func.func @transform_5(%arg0: i32) -> (i32, i32) {
    %c0_i32 = arith.constant 0 : i32
    %c0_i32_0 = arith.constant 0 : i32
    return %c0_i32, %arg0 : i32, i32
  }
}

</mosaic_0001>

<llo_original>
// kernel: tpu_custom_call.1
$region0: #{tpu_custom_call.1}
  #allocation0 [shape = 'u32[]', space=smem, size = 0x4, offset = 0x4, fixed_abs, tag = 'smem constant byte address 0x4 - core index']
  #allocation1 [shape = 'u32[72,128]{1,0:T(1,128)}', space=vmem, size = 0x9000, scoped, tag = 'internal scratch']
  %s0 = inlined_call_operand.vmem [shape: f32[16,2], index: 0, kind: input, shape index: {}]
  %s1 = inlined_call_operand.vmem [shape: f32[32,16], index: 1, kind: input, shape index: {}]
  %s2 = inlined_call_operand.vmem [shape: f32[32,1], index: 2, kind: input, shape index: {}]
  %s3 = inlined_call_operand.vmem [shape: f32[4,32], index: 3, kind: input, shape index: {}]
  %s4 = inlined_call_operand.vmem [shape: f32[4,1], index: 4, kind: input, shape index: {}]
  %s5 = inlined_call_operand.vmem [shape: f32[4,2], index: 5, kind: output, shape index: {}]
  %s6 = sld [smem:[#allocation0]]
  $region30: #{tpu_custom_call.1} parent=0
    _
  %s8 = ssub.s32 1, %s6
  %s9 = scalar_select 0, %s8, %s6
  // Predicated region
  $region2: #{tpu_custom_call.1} parent=0 // pred_check
    _
  $region3: #{tpu_custom_call.1} parent=0 // pred_check_branch
    %11 = sbr.rel (0) target = $region5
  $region4: #{tpu_custom_call.1} parent=0 // pred_region
    _
  $region5: #{tpu_custom_call.1} parent=0 // pred_fallthru
    _
  // Predicated region
  $region6: #{tpu_custom_call.1} parent=0 // pred_check
    _
  $region7: #{tpu_custom_call.1} parent=0 // pred_check_branch
    %13 = sbr.rel (0) target = $region9
  $region8: #{tpu_custom_call.1} parent=0 // pred_region
    _
  $region9: #{tpu_custom_call.1} parent=0 // pred_fallthru
    _
  // Predicated region
  $region10: #{tpu_custom_call.1} parent=0 // pred_check
    _
  $region11: #{tpu_custom_call.1} parent=0 // pred_check_branch
    %15 = sbr.rel (0) target = $region13
  $region12: #{tpu_custom_call.1} parent=0 // pred_region
    _
  $region13: #{tpu_custom_call.1} parent=0 // pred_fallthru
    _
  // Predicated region
  $region14: #{tpu_custom_call.1} parent=0 // pred_check
    _
  $region15: #{tpu_custom_call.1} parent=0 // pred_check_branch
    %17 = sbr.rel (0) target = $region17
  $region16: #{tpu_custom_call.1} parent=0 // pred_region
    _
  $region17: #{tpu_custom_call.1} parent=0 // pred_fallthru
    _
  // Predicated region
  $region18: #{tpu_custom_call.1} parent=0 // pred_check
    _
  $region19: #{tpu_custom_call.1} parent=0 // pred_check_branch
    %19 = sbr.rel (0) target = $region21
  $region20: #{tpu_custom_call.1} parent=0 // pred_region
    _
  $region21: #{tpu_custom_call.1} parent=0 // pred_fallthru
    _
  %v20 = vld [vmem:[%s1] sm:$0xff]
  %v21 = vld [vmem:[%s1 + $0x8] sm:$0xff]
  %v22 = vld [vmem:[%s1 + $0x10] sm:$0xff]
  %v23 = vld [vmem:[%s1 + $0x18] sm:$0xff]
  %v24 = vld [vmem:[%s0] sm:$0xff]
  %v25 = vld [vmem:[%s0 + $0x8] sm:$0xff]
  %v26 = vld [vmem:[%s2] sm:$0xff]
  %v27 = vld [vmem:[%s2 + $0x8] sm:$0xff]
  %v28 = vld [vmem:[%s2 + $0x10] sm:$0xff]
  %v29 = vld [vmem:[%s2 + $0x18] sm:$0xff]
  %31 = vset.pattern.permute.xlu0 0
  %32 = vperm.xlu0 %31, %v26
  %v33 = vpop.permute.xlu0 %32
  %36 = vset.pattern.permute.xlu0 0
  %37 = vperm.xlu0 %36, %v27
  %v38 = vpop.permute.xlu0 %37
  %41 = vset.pattern.permute.xlu0 0
  %42 = vperm.xlu0 %41, %v28
  %v43 = vpop.permute.xlu0 %42
  %46 = vset.pattern.permute.xlu0 0
  %47 = vperm.xlu0 %46, %v29
  %v48 = vpop.permute.xlu0 %47
  %vm50 = vcmask 130048
  %v52 = vsel %vm50, %v20, 0
  %v55 = vsel %vm50, %v21, 0
  %v58 = vsel %vm50, %v22, 0
  %v61 = vsel %vm50, %v23, 0
  %63 = vmatpush.msra.mxu0 0.0
  %64 = vmatpush.msra.mxu0 0.0
  %65 = vmatpush.msra.mxu0 0.0
  %66 = vmatpush.msra.mxu0 0.0
  %67 = vmatpush.msra.mxu0 0.0
  %68 = vmatpush.msra.mxu0 0.0
  %69 = vmatpush.msra.mxu0 0.0
  %70 = vmatpush.msra.mxu0 0.0
  %71 = vmatpush.msra.mxu0 0.0
  %72 = vmatpush.msra.mxu0 0.0
  %73 = vmatpush.msra.mxu0 0.0
  %74 = vmatpush.msra.mxu0 0.0
  %75 = vmatpush.msra.mxu0 0.0
  %76 = vmatpush.msra.mxu0 0.0
  %77 = vmatpush.msra.mxu0 %v25
  %78 = vmatpush.msra.mxu0 %v24
  %79 = vmatmul.f32.gmra.mxu0 %v52
  %v80 = vpop.f32.mrf.mxu0
  %v81 = vadd.f32 %v33, %v80
  %82 = vmatmul.f32.gmra.mxu0 %v55
  %v83 = vpop.f32.mrf.mxu0
  %v84 = vadd.f32 %v38, %v83
  %85 = vmatmul.f32.gmra.mxu0 %v58
  %v86 = vpop.f32.mrf.mxu0
  %v87 = vadd.f32 %v43, %v86
  %88 = vmatmul.f32.gmra.mxu0 %v61
  %v89 = vpop.f32.mrf.mxu0
  %v90 = vadd.f32 %v48, %v89
  %91 = vdwg.mxu0
  %v92 = vmax.f32 %v81, 0.0
  %v93 = vmax.f32 %v84, 0.0
  %v94 = vmax.f32 %v87, 0.0
  %v95 = vmax.f32 %v90, 0.0
  %v96 = vld [vmem:[%s3] sm:$0xf]
  %v97 = vld [vmem:[%s4] sm:$0xf]
  %99 = vset.pattern.permute.xlu0 0
  %100 = vperm.xlu0 %99, %v97
  %v101 = vpop.permute.xlu0 %100
  %vm103 = vcmask 261120
  %v105 = vsel %vm103, %v96, 0
  %107 = vmatpush.msra.mxu0 0.0
  %108 = vmatpush.msra.mxu0 0.0
  %109 = vmatpush.msra.mxu0 0.0
  %110 = vmatpush.msra.mxu0 0.0
  %111 = vmatpush.msra.mxu0 0.0
  %112 = vmatpush.msra.mxu0 0.0
  %113 = vmatpush.msra.mxu0 0.0
  %114 = vmatpush.msra.mxu0 0.0
  %115 = vmatpush.msra.mxu0 0.0
  %116 = vmatpush.msra.mxu0 0.0
  %117 = vmatpush.msra.mxu0 0.0
  %118 = vmatpush.msra.mxu0 0.0
  %119 = vmatpush.msra.mxu0 %v95
  %120 = vmatpush.msra.mxu0 %v94
  %121 = vmatpush.msra.mxu0 %v93
  %122 = vmatpush.msra.mxu0 %v92
  %123 = vmatmul.f32.gmra.mxu0 %v105
  %v124 = vpop.f32.mrf.mxu0
  %v125 = vadd.f32 %v101, %v124
  %126 = vdwg.mxu0
  %vm127 = vcmask 11264
  %128 = vst.msk [vmem:[%s5] sm:$0xf] %vm127, %v125
  // Predicated region
  $region22: #{tpu_custom_call.1} parent=0 // pred_check
    _
  $region23: #{tpu_custom_call.1} parent=0 // pred_check_branch
    %130 = sbr.rel (0) target = $region25
  $region24: #{tpu_custom_call.1} parent=0 // pred_region
    _
  $region25: #{tpu_custom_call.1} parent=0 // pred_fallthru
    _
  // Predicated region
  $region26: #{tpu_custom_call.1} parent=0 // pred_check
    _
  $region27: #{tpu_custom_call.1} parent=0 // pred_check_branch
    %132 = sbr.rel (0) target = $region29
  $region28: #{tpu_custom_call.1} parent=0 // pred_region
    _
  $region29: #{tpu_custom_call.1} parent=0 // pred_fallthru
    _

</llo_original>
